<compile_context>
chip_gen: v6e
topology: v6e:2x2x1
jax: 0.10.0
libtpu: 0.0.40
codegen_flags: <defaults>
</compile_context>

<pallas_src>
import functools

import jax
import jax.numpy as jnp
from jax import lax
from jax.experimental import pallas as pl
from jax.experimental.pallas import tpu as pltpu

_LANE = 128      # lanes per vreg
_SUB = 8         # sublanes per vreg
_NUM_SHARDS = 2  # leading "parallel" grid axis (split across TCs on v7x)


def _mse_kernel(x_ref, y_ref, o_ref, acc_ref, *,
                n_full_rows, n_rem, block_rows, inner_steps):
    """Accumulate sum((x - y)^2) per shard; emit a per-shard partial sum."""
    i = pl.program_id(0)   # shard axis ("parallel")
    j = pl.program_id(1)   # reduction axis ("arbitrary")

    @pl.when(j == 0)
    def _():
        acc_ref[...] = jnp.zeros_like(acc_ref)

    # Load in native dtype, cast in-kernel (halves HBM traffic for bf16/fp16;
    # no-op for f32). Accumulate in f32.
    x = x_ref[...].astype(jnp.float32)
    y = y_ref[...].astype(jnp.float32)
    d = x - y
    sq = d * d

    def fold(v):
        # (block_rows, 128) -> (8, 128): vreg-wise VPU adds only, no XLU.
        return v.reshape(block_rows // _SUB, _SUB, _LANE).sum(axis=0)

    # Logical (unclamped) block index for this step. The input index_map is
    # clamped so DMAs never go out of bounds; masking below uses the logical
    # position, so tail / phantom blocks contribute exactly zero.
    blk = i * inner_steps + j
    row0 = blk * block_rows

    # Fast path: every element of this block is in range (steady state).
    @pl.when(row0 + block_rows <= n_full_rows)
    def _():
        acc_ref[...] += fold(sq)

    # Tail / phantom blocks: mask by global (row, lane) position.
    @pl.when(row0 + block_rows > n_full_rows)
    def _():
        g_row = row0 + lax.broadcasted_iota(jnp.int32, sq.shape, 0)
        lane = lax.broadcasted_iota(jnp.int32, sq.shape, 1)
        valid = (g_row < n_full_rows) | ((g_row == n_full_rows) & (lane < n_rem))
        acc_ref[...] += fold(jnp.where(valid, sq, 0.0))

    # One cross-lane (XLU) reduction per shard, at the last reduction step.
    @pl.when(j == pl.num_programs(1) - 1)
    def _():
        o_ref[...] = jnp.sum(acc_ref[...]).reshape(1, 1, 1)


def _round_up(a, m):
    return (a + m - 1) // m * m


def mse_loss(inputs, targets, *, block_rows=2048):
    """Pallas equivalent of torch.mean((inputs - targets) ** 2)."""
    assert inputs.shape == targets.shape
    assert block_rows % _SUB == 0
    n = inputs.size

    x = inputs.reshape(-1)
    y = targets.reshape(-1)

    # A (rows, 128) view needs a lane-aligned flat size. Typical tensor sizes
    # are already multiples of 128; the pad is a rare fallback (values in the
    # pad are masked off in-kernel anyway).
    lane_pad = (-n) % _LANE
    if lane_pad:
        x = jnp.pad(x, (0, lane_pad))
        y = jnp.pad(y, (0, lane_pad))
    rows = x.size // _LANE
    x2 = x.reshape(rows, _LANE)
    y2 = y.reshape(rows, _LANE)

    # Row-block: large enough to amortize per-step overhead, small enough that
    # 2 inputs x 2 pipeline buffers stays inside the default scoped VMEM on
    # v5e (16 MiB) / v6e (32 MiB) / v7x (32 MiB of 64 MiB physical).
    br = min(block_rows, _round_up(rows, _SUB))
    n_blocks = pl.cdiv(rows, br)
    inner_steps = pl.cdiv(n_blocks, _NUM_SHARDS)

    def in_index_map(i, j):
        # Clamp so the DMA never reads out of bounds; phantom blocks are
        # zeroed out by the in-kernel mask.
        return (jnp.minimum(i * inner_steps + j, n_blocks - 1), 0)

    kernel = functools.partial(
        _mse_kernel,
        n_full_rows=n // _LANE,
        n_rem=n % _LANE,
        block_rows=br,
        inner_steps=inner_steps,
    )

    bytes_in = x2.size * x2.dtype.itemsize + y2.size * y2.dtype.itemsize
    partials = pl.pallas_call(
        kernel,
        out_shape=jax.ShapeDtypeStruct((_NUM_SHARDS, 1, 1), jnp.float32),
        grid_spec=pltpu.PrefetchScalarGridSpec(
            num_scalar_prefetch=0,
            grid=(_NUM_SHARDS, inner_steps),
            in_specs=[
                pl.BlockSpec((br, _LANE), in_index_map),
                pl.BlockSpec((br, _LANE), in_index_map),
            ],
            out_specs=pl.BlockSpec((1, 1, 1), lambda i, j: (i, 0, 0)),
            scratch_shapes=[pltpu.VMEM((_SUB, _LANE), jnp.float32)],
        ),
        compiler_params=pltpu.CompilerParams(
            dimension_semantics=("parallel", "arbitrary"),
        ),
        cost_estimate=pl.CostEstimate(
            flops=3 * n,
            transcendentals=0,
            bytes_accessed=bytes_in + _NUM_SHARDS * 4,
        ),
    )(x2, y2)

    # Combine the per-core partial sums and scale to the mean.
    return jnp.sum(partials) * jnp.float32(1.0 / n)


if __name__ == "__main__":
    key = jax.random.PRNGKey(0)
    k1, k2 = jax.random.split(key)
    # Small NCHW-like shapes consistent with a typical loss input.
    inputs = jax.random.normal(k1, (2, 4, 16, 16), dtype=jnp.float32)
    targets = jax.random.normal(k2, (2, 4, 16, 16), dtype=jnp.float32)

    loss = jax.jit(mse_loss)(inputs, targets)
    jax.block_until_ready(loss)

    # Sanity check vs. plain-JAX reference.
    ref = jnp.mean((inputs - targets) ** 2)
    assert jnp.allclose(loss, ref, rtol=1e-6, atol=1e-6), (loss, ref)
    print("KERNEL_OK")
</pallas_src>

<mosaic_0001>
module attributes {stable_mosaic.version = 11 : i64} {
  func.func @_mse_kernel(%arg0: i32, %arg1: i32, %arg2: memref<16x128xf32, #tpu.memory_space<vmem>>, %arg3: memref<16x128xf32, #tpu.memory_space<vmem>>, %arg4: memref<1x1x1xf32, #tpu.memory_space<vmem>>, %arg5: memref<8x128xf32, #tpu.memory_space<vmem>>) attributes {dimension_semantics = [#tpu.dimension_semantics<parallel>, #tpu.dimension_semantics<arbitrary>], iteration_bounds = array<i64: 2, 1>, scalar_prefetch = 0 : i64, scratch_operands = 1 : i64, tpu.core_type = #tpu.core_type<tc>, window_params = [{transform_indices = @transform_0, window_bounds = array<i64: 16, 128>}, {transform_indices = @transform_1, window_bounds = array<i64: 16, 128>}, {transform_indices = @transform_2, window_bounds = array<i64: 1, 1, 1>}]} {
    %c0_i32 = arith.constant 0 : i32
    %0 = arith.cmpi eq, %arg1, %c0_i32 : i32
    %1 = arith.extui %0 : i1 to i32
    %c0_i32_0 = arith.constant 0 : i32
    %2 = arith.cmpi ne, %1, %c0_i32_0 : i32
    scf.if %2 {
      %cst = arith.constant 0.000000e+00 : f32
      %21 = vector.broadcast %cst : f32 to vector<8x128xf32>
      %c0_12 = arith.constant 0 : index
      %c0_13 = arith.constant 0 : index
      %22 = vector.load %arg5[%c0_12, %c0_13] : memref<8x128xf32, #tpu.memory_space<vmem>>, vector<8x128xf32>
      tpu.vector_store %arg5[%c0_12, %c0_13], %21 {strides = array<i32>} : memref<8x128xf32, #tpu.memory_space<vmem>>, vector<8x128xf32>,
    } else {
    }
    %c0 = arith.constant 0 : index
    %c0_1 = arith.constant 0 : index
    %3 = vector.load %arg2[%c0, %c0_1] : memref<16x128xf32, #tpu.memory_space<vmem>>, vector<16x128xf32>
    %c0_2 = arith.constant 0 : index
    %c0_3 = arith.constant 0 : index
    %4 = vector.load %arg3[%c0_2, %c0_3] : memref<16x128xf32, #tpu.memory_space<vmem>>, vector<16x128xf32>
    %5 = arith.subf %3, %4 : vector<16x128xf32>
    %6 = arith.mulf %5, %5 : vector<16x128xf32>
    %c1_i32 = arith.constant 1 : i32
    %7 = arith.muli %arg0, %c1_i32 : i32
    %8 = arith.addi %7, %arg1 : i32
    %c16_i32 = arith.constant 16 : i32
    %9 = arith.muli %8, %c16_i32 : i32
    %c16_i32_4 = arith.constant 16 : i32
    %10 = arith.addi %9, %c16_i32_4 : i32
    %c16_i32_5 = arith.constant 16 : i32
    %11 = arith.cmpi sle, %10, %c16_i32_5 : i32
    %12 = arith.extui %11 : i1 to i32
    %c0_i32_6 = arith.constant 0 : i32
    %13 = arith.cmpi ne, %12, %c0_i32_6 : i32
    scf.if %13 {
      %c0_12 = arith.constant 0 : index
      %c0_13 = arith.constant 0 : index
      %21 = vector.load %arg5[%c0_12, %c0_13] : memref<8x128xf32, #tpu.memory_space<vmem>>, vector<8x128xf32>
      %22 = vector.shape_cast %6 : vector<16x128xf32> to vector<2x8x128xf32>
      %cst = arith.constant dense<0.000000e+00> : vector<8x128xf32>
      %23 = vector.multi_reduction <add>, %22, %cst [0] : vector<2x8x128xf32> to vector<8x128xf32>
      %24 = arith.addf %21, %23 : vector<8x128xf32>
      %c0_14 = arith.constant 0 : index
      %c0_15 = arith.constant 0 : index
      %25 = vector.load %arg5[%c0_14, %c0_15] : memref<8x128xf32, #tpu.memory_space<vmem>>, vector<8x128xf32>
      tpu.vector_store %arg5[%c0_14, %c0_15], %24 {strides = array<i32>} : memref<8x128xf32, #tpu.memory_space<vmem>>, vector<8x128xf32>,
    } else {
    }
    %c16_i32_7 = arith.constant 16 : i32
    %14 = arith.addi %9, %c16_i32_7 : i32
    %c16_i32_8 = arith.constant 16 : i32
    %15 = arith.cmpi sgt, %14, %c16_i32_8 : i32
    %16 = arith.extui %15 : i1 to i32
    %c0_i32_9 = arith.constant 0 : i32
    %17 = arith.cmpi ne, %16, %c0_i32_9 : i32
    scf.if %17 {
      %21 = tpu.iota {dimensions = array<i32: 0>} : vector<16x128xi32>
      %22 = vector.broadcast %9 : i32 to vector<16x128xi32>
      %23 = arith.addi %22, %21 : vector<16x128xi32>
      %24 = tpu.iota {dimensions = array<i32: 1>} : vector<16x128xi32>
      %c16_i32_12 = arith.constant 16 : i32
      %25 = vector.broadcast %c16_i32_12 : i32 to vector<16x128xi32>
      %26 = arith.cmpi slt, %23, %25 : vector<16x128xi32>
      %c16_i32_13 = arith.constant 16 : i32
      %27 = vector.broadcast %c16_i32_13 : i32 to vector<16x128xi32>
      %28 = arith.cmpi eq, %23, %27 : vector<16x128xi32>
      %c0_i32_14 = arith.constant 0 : i32
      %29 = vector.broadcast %c0_i32_14 : i32 to vector<16x128xi32>
      %30 = arith.cmpi slt, %24, %29 : vector<16x128xi32>
      %31 = arith.andi %28, %30 : vector<16x128xi1>
      %32 = arith.ori %26, %31 : vector<16x128xi1>
      %c0_15 = arith.constant 0 : index
      %c0_16 = arith.constant 0 : index
      %33 = vector.load %arg5[%c0_15, %c0_16] : memref<8x128xf32, #tpu.memory_space<vmem>>, vector<8x128xf32>
      %cst = arith.constant 0.000000e+00 : f32
      %34 = vector.broadcast %cst : f32 to vector<16x128xf32>
      %35 = arith.select %32, %6, %34 : vector<16x128xi1>, vector<16x128xf32>
      %36 = vector.shape_cast %35 : vector<16x128xf32> to vector<2x8x128xf32>
      %cst_17 = arith.constant dense<0.000000e+00> : vector<8x128xf32>
      %37 = vector.multi_reduction <add>, %36, %cst_17 [0] : vector<2x8x128xf32> to vector<8x128xf32>
      %38 = arith.addf %33, %37 : vector<8x128xf32>
      %c0_18 = arith.constant 0 : index
      %c0_19 = arith.constant 0 : index
      %39 = vector.load %arg5[%c0_18, %c0_19] : memref<8x128xf32, #tpu.memory_space<vmem>>, vector<8x128xf32>
      tpu.vector_store %arg5[%c0_18, %c0_19], %38 {strides = array<i32>} : memref<8x128xf32, #tpu.memory_space<vmem>>, vector<8x128xf32>,
    } else {
    }
    %c0_i32_10 = arith.constant 0 : i32
    %18 = arith.cmpi eq, %arg1, %c0_i32_10 : i32
    %19 = arith.extui %18 : i1 to i32
    %c0_i32_11 = arith.constant 0 : i32
    %20 = arith.cmpi ne, %19, %c0_i32_11 : i32
    scf.if %20 {
      %c0_12 = arith.constant 0 : index
      %c0_13 = arith.constant 0 : index
      %21 = vector.load %arg5[%c0_12, %c0_13] : memref<8x128xf32, #tpu.memory_space<vmem>>, vector<8x128xf32>
      %22 = vector.shape_cast %21 : vector<8x128xf32> to vector<1x8x128xf32>
      %cst = arith.constant dense<0.000000e+00> : vector<1xf32>
      %23 = vector.multi_reduction <add>, %22, %cst [1, 2] : vector<1x8x128xf32> to vector<1xf32>
      %24 = vector.shape_cast %23 : vector<1xf32> to vector<1x1x1xf32>
      %25 = vector.extract %24[0, 0, 0] : f32 from vector<1x1x1xf32>
      %26 = vector.broadcast %25 : f32 to vector<1x1x1xf32>
      %c0_14 = arith.constant 0 : index
      %c0_15 = arith.constant 0 : index
      %c0_16 = arith.constant 0 : index
      %27 = vector.load %arg4[%c0_14, %c0_15, %c0_16] : memref<1x1x1xf32, #tpu.memory_space<vmem>>, vector<1x1x1xf32>
      tpu.vector_store %arg4[%c0_14, %c0_15, %c0_16], %26 {strides = array<i32>} : memref<1x1x1xf32, #tpu.memory_space<vmem>>, vector<1x1x1xf32>,
    } else {
    }
    return
  }
  func.func @transform_0(%arg0: i32, %arg1: i32) -> (i32, i32) {
    %c1_i32 = arith.constant 1 : i32
    %0 = arith.muli %arg0, %c1_i32 : i32
    %1 = arith.addi %0, %arg1 : i32
    %c0_i32 = arith.constant 0 : i32
    %2 = arith.minsi %1, %c0_i32 : i32
    %c0_i32_0 = arith.constant 0 : i32
    %c0_i32_1 = arith.constant 0 : i32
    return %2, %c0_i32_0 : i32, i32
  }
  func.func @transform_1(%arg0: i32, %arg1: i32) -> (i32, i32) {
    %c1_i32 = arith.constant 1 : i32
    %0 = arith.muli %arg0, %c1_i32 : i32
    %1 = arith.addi %0, %arg1 : i32
    %c0_i32 = arith.constant 0 : i32
    %2 = arith.minsi %1, %c0_i32 : i32
    %c0_i32_0 = arith.constant 0 : i32
    %c0_i32_1 = arith.constant 0 : i32
    return %2, %c0_i32_0 : i32, i32
  }
  func.func @transform_2(%arg0: i32, %arg1: i32) -> (i32, i32, i32) {
    %c0_i32 = arith.constant 0 : i32
    %c0_i32_0 = arith.constant 0 : i32
    %c0_i32_1 = arith.constant 0 : i32
    return %arg0, %c0_i32, %c0_i32_0 : i32, i32, i32
  }
}

</mosaic_0001>

<llo_original>
// kernel: mse_loss.1
$region0: #{mse_loss.1}
  #allocation0 [shape = 'u32[]', space=smem, size = 0x4, offset = 0x4, fixed_abs, tag = 'smem constant byte address 0x4 - core index']
  #allocation1 [shape = 'u32[144,128]{1,0:T(1,128)}', space=vmem, size = 0x12000, scoped, tag = 'internal scratch']
  #allocation2 [shape = 'f32[8,128]{1,0:T(8,128)}', space=vmem, size = 0x1000, scoped, tag = 'scratch operand']
  %s0 = inlined_call_operand.vmem [shape: f32[16,128], index: 0, kind: input, shape index: {}]
  %s1 = inlined_call_operand.vmem [shape: f32[16,128], index: 1, kind: input, shape index: {}]
  %s2 = inlined_call_operand.vmem [shape: f32[2,1,1], index: 2, kind: output, shape index: {}]
  %s3 = sld [smem:[#allocation0]]
  $region57: #{mse_loss.1} parent=0
    _
  %s5 = ssub.s32 1, %s3
  %s6 = scalar_select 0, %s5, %s3
  loop: start=0, step=1, limit=4
  $region2: #{mse_loss.1} parent=0 // loop_pre_header
    _
  $region3: #{mse_loss.1} parent=0 // loop_header
    %s8 = sphi 0, %s12
    %p9 = scmp.ge.s32.totalorder %s8, 4
    %s15 = sphi 0, %s27
    %s16 = sphi 0, %s23
    %s17 = sphi 0, %s15
    %s18 = sphi 0, %s16
    %s19 = sphi 0, %s17
    %s20 = sphi 0, %s18
    %s36 = sphi 0, %s38
    %s39 = sphi 0, %s36
    %s40 = sphi 0, %s39
    %s56 = sphi 0, %s40
    %s68 = sphi 0, %s70
    %s71 = sphi 0, %s68
    %s72 = sphi 0, %s71
    %s88 = sphi 0, %s72
    %s94 = sphi 0, %s96
    %s97 = sphi 0, %s94
    %s98 = sphi 0, %s97
    %s114 = sphi 0, %s98
  $region4: #{mse_loss.1} parent=0 // loop_header_branch
    %11 = sbr.rel (%p9) target = $region8
  $region5: #{mse_loss.1} parent=0 // loop_body
    %s13 = ssub.s32 %s8, 1
    %s14 = ssub.s32 %s8, 2
    %s21 = sadd.s32 1, %s16
    %p22 = scmp.ge.s32.totalorder %s21, 1
    %s23 = scalar_select %p22, 0, %s21
    %s24 = sadd.s32 1, %s15
    %s25 = scalar_select %p22, %s24, %s15
    %p26 = scmp.ge.s32.totalorder %s25, 2
    %s27 = scalar_select %p26, 0, %s25
    %s28 = sadd.s32 %s15, %s16
    %p29 = scmp.lt.s32.totalorder %s28, 0
    %s30 = scalar_select %p29, %s28, 0
    %s31 = sadd.s32 %s27, %s23
    %p32 = scmp.lt.s32.totalorder %s31, 0
    %s33 = scalar_select %p32, %s31, 0
    %s34 = ssub.s32 %s30, %s33
    %p35 = scmp.eq.s32.totalorder %s34, 0
    %s37 = sadd.s32 %s36, 1
    %s38 = scalar_select %p35, %s36, %s37
    %p41 = pneg %p35
    %p42 = scmp.eq.s32.totalorder %s8, 1
    %p43 = por %p41, %p42
    %p44 = scmp.ne.s32.totalorder %s36, %s39
    %p45 = scmp.eq.s32.totalorder %s8, 0
    %p46 = por %p44, %p45
    %p47 = scmp.ne.s32.totalorder %s36, %s39
    %p48 = scmp.eq.s32.totalorder %s13, 1
    %p49 = por %p47, %p48
    %p50 = scmp.ne.s32.totalorder %s39, %s40
    %p51 = scmp.eq.s32.totalorder %s13, 0
    %p52 = por %p50, %p51
    %p53 = scmp.ne.s32.totalorder %s39, %s40
    %p54 = scmp.eq.s32.totalorder %s14, 1
    %p55 = por %p53, %p54
    %p57 = scmp.ne.s32.totalorder %s40, %s56
    %p58 = scmp.eq.s32.totalorder %s14, 0
    %p59 = por %p57, %p58
    %s60 = sadd.s32 %s15, %s16
    %p61 = scmp.lt.s32.totalorder %s60, 0
    %s62 = scalar_select %p61, %s60, 0
    %s63 = sadd.s32 %s27, %s23
    %p64 = scmp.lt.s32.totalorder %s63, 0
    %s65 = scalar_select %p64, %s63, 0
    %s66 = ssub.s32 %s62, %s65
    %p67 = scmp.eq.s32.totalorder %s66, 0
    %s69 = sadd.s32 %s68, 1
    %s70 = scalar_select %p67, %s68, %s69
    %p73 = pneg %p67
    %p74 = scmp.eq.s32.totalorder %s8, 1
    %p75 = por %p73, %p74
    %p76 = scmp.ne.s32.totalorder %s68, %s71
    %p77 = scmp.eq.s32.totalorder %s8, 0
    %p78 = por %p76, %p77
    %p79 = scmp.ne.s32.totalorder %s68, %s71
    %p80 = scmp.eq.s32.totalorder %s13, 1
    %p81 = por %p79, %p80
    %p82 = scmp.ne.s32.totalorder %s71, %s72
    %p83 = scmp.eq.s32.totalorder %s13, 0
    %p84 = por %p82, %p83
    %p85 = scmp.ne.s32.totalorder %s71, %s72
    %p86 = scmp.eq.s32.totalorder %s14, 1
    %p87 = por %p85, %p86
    %p89 = scmp.ne.s32.totalorder %s72, %s88
    %p90 = scmp.eq.s32.totalorder %s14, 0
    %p91 = por %p89, %p90
    %s92 = ssub.s32 %s15, %s27
    %p93 = scmp.eq.s32.totalorder %s92, 0
    %s95 = sadd.s32 %s94, 1
    %s96 = scalar_select %p93, %s94, %s95
    %p99 = pneg %p93
    %p100 = scmp.eq.s32.totalorder %s8, 1
    %p101 = por %p99, %p100
    %p102 = scmp.ne.s32.totalorder %s94, %s97
    %p103 = scmp.eq.s32.totalorder %s8, 0
    %p104 = por %p102, %p103
    %p105 = scmp.ne.s32.totalorder %s94, %s97
    %p106 = scmp.eq.s32.totalorder %s13, 1
    %p107 = por %p105, %p106
    %p108 = scmp.ne.s32.totalorder %s97, %s98
    %p109 = scmp.eq.s32.totalorder %s13, 0
    %p110 = por %p108, %p109
    %p111 = scmp.ne.s32.totalorder %s97, %s98
    %p112 = scmp.eq.s32.totalorder %s14, 1
    %p113 = por %p111, %p112
    %p115 = scmp.ne.s32.totalorder %s98, %s114
    %p116 = scmp.eq.s32.totalorder %s14, 0
    %p117 = por %p115, %p116
    %p118 = scmp.le.s32.totalorder 1, %s8
    %p119 = scmp.lt.s32.totalorder %s8, 3
    %p120 = pnand %p118, %p119
    %p121 = pneg %p120
    // Predicated region
    $region9: #{mse_loss.1} parent=5 // pred_check
      _
    $region10: #{mse_loss.1} parent=5 // pred_check_branch
      %123 = sbr.rel (%p120) target = $region12
    $region11: #{mse_loss.1} parent=5 // pred_region
      %s124 = ssub.s32 %s8, 1
    $region12: #{mse_loss.1} parent=5 // pred_fallthru
      _
    %p125 = scmp.lt.s32.totalorder %s8, 2
    // Predicated region
    $region13: #{mse_loss.1} parent=5 // pred_check
      %p126 = pneg %p125
    $region14: #{mse_loss.1} parent=5 // pred_check_branch
      %128 = sbr.rel (%p126) target = $region16
    $region15: #{mse_loss.1} parent=5 // pred_region
      // Predicated region
      $region17: #{mse_loss.1} parent=15 // pred_check
        %p129 = pneg %p46
      $region18: #{mse_loss.1} parent=15 // pred_check_branch
        %131 = sbr.rel (%p129) target = $region20
      $region19: #{mse_loss.1} parent=15 // pred_region
        %s132 = sadd.s32 %s15, %s16
        %p133 = scmp.lt.s32.totalorder %s132, 0
        %s134 = scalar_select %p133, %s132, 0
        %s135 = smul.u32 2, %s134
        %p136 = scmp.lt.s32.totalorder %s135, 1
        %s137 = scalar_select %p136, %s135, 1
        %s138 = smul.addr %s137, 8
        %s139 = scalar_lea.vmem %s0, %s138
        %s140 = sadd.s32 %s15, %s16
        %p141 = scmp.lt.s32.totalorder %s140, 0
        %s142 = scalar_select %p141, %s140, 0
        %s143 = smul.u32 2, %s142
      $region20: #{mse_loss.1} parent=15 // pred_fallthru
        _
      // Predicated region
      $region21: #{mse_loss.1} parent=15 // pred_check
        %p144 = pneg %p78
      $region22: #{mse_loss.1} parent=15 // pred_check_branch
        %146 = sbr.rel (%p144) target = $region24
      $region23: #{mse_loss.1} parent=15 // pred_region
        %s147 = sadd.s32 %s15, %s16
        %p148 = scmp.lt.s32.totalorder %s147, 0
        %s149 = scalar_select %p148, %s147, 0
        %s150 = smul.u32 2, %s149
        %p151 = scmp.lt.s32.totalorder %s150, 1
        %s152 = scalar_select %p151, %s150, 1
        %s153 = smul.addr %s152, 8
        %s154 = scalar_lea.vmem %s1, %s153
        %s155 = sadd.s32 %s15, %s16
        %p156 = scmp.lt.s32.totalorder %s155, 0
        %s157 = scalar_select %p156, %s155, 0
        %s158 = smul.u32 2, %s157
      $region24: #{mse_loss.1} parent=15 // pred_fallthru
        _
    $region16: #{mse_loss.1} parent=5 // pred_fallthru
      _
    %p159 = scmp.le.s32.totalorder 1, %s8
    %p160 = scmp.lt.s32.totalorder %s8, 3
    %p161 = pnand %p159, %p160
    %p162 = pneg %p161
    // Predicated region
    $region25: #{mse_loss.1} parent=5 // pred_check
      _
    $region26: #{mse_loss.1} parent=5 // pred_check_branch
      %164 = sbr.rel (%p161) target = $region28
    $region27: #{mse_loss.1} parent=5 // pred_region
      %s165 = ssub.s32 %s8, 1
      %s166 = sadd.s32 %s17, %s18
      %p167 = scmp.lt.s32.totalorder %s166, 0
      %s168 = scalar_select %p167, %s166, 0
      %s169 = smul.u32 2, %s168
      %p170 = scmp.lt.s32.totalorder %s169, 1
      %s171 = scalar_select %p170, %s169, 1
      %s172 = smul.addr %s171, 8
      %s173 = scalar_lea.vmem %s0, %s172
      %p174 = pneg %p52
      %p175 = pneg %p49
      %s176 = sadd.s32 %s17, %s18
      %p177 = scmp.lt.s32.totalorder %s176, 0
      %s178 = scalar_select %p177, %s176, 0
      %s179 = smul.u32 2, %s178
      %p180 = scmp.lt.s32.totalorder %s179, 1
      %s181 = scalar_select %p180, %s179, 1
      %s182 = smul.addr %s181, 8
      %s183 = scalar_lea.vmem %s1, %s182
      %p184 = pneg %p84
      %p185 = pneg %p81
      %p186 = pneg %p110
      %p187 = pneg %p107
      %p188 = scmp.lt.s32.totalorder %s17, 1
      %s189 = scalar_select %p188, %s17, 1
      %s190 = scalar_lea.vmem %s2, %s189
      %s191 = sadd.s32 %s17, %s18
      %p192 = scmp.lt.s32.totalorder %s191, 0
      %s193 = scalar_select %p192, %s191, 0
      %s194 = smul.u32 2, %s193
      %p195 = scmp.lt.s32.totalorder %s194, 1
      %s196 = scalar_select %p195, %s194, 1
      %s197 = smul.addr %s196, 8
      %s198 = scalar_lea.vmem %s0, %s197
      %s199 = sadd.s32 %s17, %s18
      %p200 = scmp.lt.s32.totalorder %s199, 0
      %s201 = scalar_select %p200, %s199, 0
      %s202 = smul.u32 2, %s201
      %s203 = sadd.s32 %s17, %s18
      %p204 = scmp.lt.s32.totalorder %s203, 0
      %s205 = scalar_select %p204, %s203, 0
      %s206 = smul.u32 2, %s205
      %p207 = scmp.lt.s32.totalorder %s206, 1
      %s208 = scalar_select %p207, %s206, 1
      %s209 = smul.addr %s208, 8
      %s210 = scalar_lea.vmem %s1, %s209
      %s211 = sadd.s32 %s17, %s18
      %p212 = scmp.lt.s32.totalorder %s211, 0
      %s213 = scalar_select %p212, %s211, 0
      %s214 = smul.u32 2, %s213
      %p215 = scmp.lt.s32.totalorder %s17, 1
      %s216 = scalar_select %p215, %s17, 1
      %s217 = scalar_lea.vmem %s2, %s216
      %p218 = scmp.eq.s32.totalorder %s18, 0
      // Predicated region
      $region29: #{mse_loss.1} parent=27 // pred_check
        %p219 = pneg %p218
      $region30: #{mse_loss.1} parent=27 // pred_check_branch
        %221 = sbr.rel (%p219) target = $region32
      $region31: #{mse_loss.1} parent=27 // pred_region
        %222 = vst [vmem:[#allocation2] sm:$0xff] 0.0
      $region32: #{mse_loss.1} parent=27 // pred_fallthru
        _
      %v223 = vld [vmem:[%s198] sm:$0xff]
      %v224 = vld [vmem:[%s198 + $0x8] sm:$0xff]
      %v225 = vld [vmem:[%s210] sm:$0xff]
      %v226 = vld [vmem:[%s210 + $0x8] sm:$0xff]
      %v227 = vsub.f32 %v223, %v225
      %v228 = vsub.f32 %v224, %v226
      %v229 = vmul.f32 %v227, %v227
      %v230 = vmul.f32 %v228, %v228
      %s231 = sadd.s32 %s17, %s18
      %s232 = smul.u32 %s231, 16
      %s233 = sadd.s32 %s232, 16
      %p234 = scmp.le.s32.totalorder %s233, 16
      // Predicated region
      $region33: #{mse_loss.1} parent=27 // pred_check
        %p235 = pneg %p234
      $region34: #{mse_loss.1} parent=27 // pred_check_branch
        %237 = sbr.rel (%p235) target = $region36
      $region35: #{mse_loss.1} parent=27 // pred_region
        %v238 = vld [vmem:[#allocation2] sm:$0xff]
        %v239 = vadd.f32 %v229, %v230
        %v240 = vadd.f32 %v238, %v239
        %241 = vst [vmem:[#allocation2] sm:$0xff] %v240
      $region36: #{mse_loss.1} parent=27 // pred_fallthru
        _
      %p242 = scmp.gt.s32.totalorder %s233, 16
      // Predicated region
      $region37: #{mse_loss.1} parent=27 // pred_check
        %p243 = pneg %p242
      $region38: #{mse_loss.1} parent=27 // pred_check_branch
        %245 = sbr.rel (%p243) target = $region40
      $region39: #{mse_loss.1} parent=27 // pred_region
        %v246 = vlaneseq
        %v247 = vshrl.u32 %v246, 7
        %v248 = vadd.s32 %v247, 8
        %v249 = vstv %s232
        %v250 = vadd.s32 %v249, %v247
        %v251 = vadd.s32 %v249, %v248
        %v252 = vlaneseq
        %v253 = vand.u32 %v252, 127
        %vm254 = vcmp.lt.s32.totalorder %v250, 16
        %vm255 = vcmp.lt.s32.totalorder %v251, 16
        %vm256 = vcmp.eq.s32.totalorder %v250, 16
        %vm257 = vcmp.eq.s32.totalorder %v251, 16
        %vm258 = vcmp.lt.s32.totalorder %v253, 0
        %vm259 = vmand %vm256, %vm258
        %vm260 = vmand %vm257, %vm258
        %vm261 = vmor %vm254, %vm259
        %vm262 = vmor %vm255, %vm260
        %v263 = vld [vmem:[#allocation2] sm:$0xff]
        %v264 = vsel %vm261, %v229, 0.0
        %v265 = vsel %vm262, %v230, 0.0
        %v266 = vadd.f32 %v264, %v265
        %v267 = vadd.f32 %v263, %v266
        %268 = vst [vmem:[#allocation2] sm:$0xff] %v267
      $region40: #{mse_loss.1} parent=27 // pred_fallthru
        _
      // Predicated region
      $region41: #{mse_loss.1} parent=27 // pred_check
        %p269 = pneg %p218
      $region42: #{mse_loss.1} parent=27 // pred_check_branch
        %271 = sbr.rel (%p269) target = $region44
      $region43: #{mse_loss.1} parent=27 // pred_region
        %v272 = vld [vmem:[#allocation2] sm:$0xff]
        %273 = vadd.xlane.f32.xlu0 %v272
        %v274 = vpop.xlane.xlu0 %273
        %v275 = vrot.slane %v274, 4
        %v276 = vadd.f32 %v274, %v275
        %v277 = vrot.slane %v276, 2
        %v278 = vadd.f32 %v276, %v277
        %v279 = vrot.slane %v278, 1
        %v280 = vadd.f32 %v278, %v279
        %s281 = vtos %v280
        %v282 = vstv %s281
        %vm283 = vcmask 0
        %284 = vst.msk [vmem:[%s217] sm:$0x1] %vm283, %v282
      $region44: #{mse_loss.1} parent=27 // pred_fallthru
        _
      %p285 = scmp.lt.s32.totalorder %s17, 1
      %s286 = scalar_select %p285, %s17, 1
      %s287 = scalar_lea.vmem %s2, %s286
      // Predicated region
      $region45: #{mse_loss.1} parent=27 // pred_check
        %p288 = pneg %p107
      $region46: #{mse_loss.1} parent=27 // pred_check_branch
        %290 = sbr.rel (%p288) target = $region48
      $region47: #{mse_loss.1} parent=27 // pred_region
        _
      $region48: #{mse_loss.1} parent=27 // pred_fallthru
        _
    $region28: #{mse_loss.1} parent=5 // pred_fallthru
      _
    %p291 = scmp.le.s32.totalorder 2, %s8
    // Predicated region
    $region49: #{mse_loss.1} parent=5 // pred_check
      %p292 = pneg %p291
    $region50: #{mse_loss.1} parent=5 // pred_check_branch
      %294 = sbr.rel (%p292) target = $region52
    $region51: #{mse_loss.1} parent=5 // pred_region
      %s295 = ssub.s32 %s8, 2
      // Predicated region
      $region53: #{mse_loss.1} parent=51 // pred_check
        %p296 = pneg %p113
      $region54: #{mse_loss.1} parent=51 // pred_check_branch
        %298 = sbr.rel (%p296) target = $region56
      $region55: #{mse_loss.1} parent=51 // pred_region
        %p299 = scmp.lt.s32.totalorder %s19, 1
        %s300 = scalar_select %p299, %s19, 1
        %s301 = scalar_lea.vmem %s2, %s300
      $region56: #{mse_loss.1} parent=51 // pred_fallthru
        _
    $region52: #{mse_loss.1} parent=5 // pred_fallthru
      _
  $region6: #{mse_loss.1} parent=0 // loop_footer
    %s12 = sadd.s32 1, %s8
  $region7: #{mse_loss.1} parent=0 // loop_footer_branch
    %7 = sbr.rel target = $region3
  $region8: #{mse_loss.1} parent=0 // loop_exit
    _

</llo_original>
